<compile_context>
chip_gen: v6e
topology: v6e:2x2x1
jax: 0.10.0
libtpu: 0.0.40
codegen_flags: <defaults>
</compile_context>

<pallas_src>
import jax
import jax.numpy as jnp
from jax.experimental import pallas as pl
from jax.experimental.pallas import tpu as pltpu

LANE = 128


def _round_up(n, m):
    return ((n + m - 1) // m) * m


def _dqn_kernel(x_ref, w1_ref, b1_ref, w2_ref, b2_ref, w3_ref, b3_ref, o_ref):
    # Fused 3-layer MLP on one batch tile. Matmul operands are bf16, MXU
    # accumulation and all elementwise math (bias add, ReLU) are f32; the
    # output is cast to bf16 only at the final lane-dense store.
    x = x_ref[...].astype(jnp.bfloat16)                               # in-kernel cast
    h1 = jnp.dot(x, w1_ref[...], preferred_element_type=jnp.float32)  # (tb, 64) f32
    h1 = jnp.maximum(h1 + b1_ref[...], 0.0)
    h2 = jnp.dot(h1.astype(jnp.bfloat16), w2_ref[...],
                 preferred_element_type=jnp.float32)                  # (tb, 64) f32
    h2 = jnp.maximum(h2 + b2_ref[...], 0.0)
    h3 = jnp.dot(h2.astype(jnp.bfloat16), w3_ref[...],
                 preferred_element_type=jnp.float32)                  # (tb, 128) f32
    o_ref[...] = (h3 + b3_ref[...]).astype(o_ref.dtype)               # bf16 lane-dense store


def prepare_params(params):
    """One-time conversion of f32 module params to kernel-ready form.

    bf16 matmul weights, f32 biases, fc3 weight/bias zero-padded to 128 output
    lanes. Call once at init; do NOT call per forward pass.
    """
    w1, b1, w2, b2, w3, b3 = (params["w1"], params["b1"], params["w2"],
                              params["b2"], params["w3"], params["b3"])
    H = w1.shape[1]
    A = w3.shape[1]
    A_pad = _round_up(max(A, LANE), LANE)
    w3p = jnp.zeros((H, A_pad), jnp.bfloat16).at[:, :A].set(w3.astype(jnp.bfloat16))
    b3p = jnp.zeros((1, A_pad), jnp.float32).at[:, :A].set(b3)
    return dict(w1=w1.astype(jnp.bfloat16), b1=b1,
                w2=w2.astype(jnp.bfloat16), b2=b2,
                w3=w3p, b3=b3p, action_size=A)


def _choose_tile(b_pad, tile_b):
    """Pick batch tile rows: multiple of 16, >=2 tiles for mid-size batches
    (so the 'parallel' axis can shard across both v7x TensorCores), multiple
    of 256 for large tiles (v6e/v7x MXU M-tile), capped at tile_b."""
    if b_pad <= 32:
        return b_pad                                  # one tiny tile
    tb = min(tile_b, _round_up(pl.cdiv(b_pad, 2), 16))
    if tb >= 512:
        tb = (tb // 256) * 256
    return min(tb, b_pad)


def dqn_forward(x, kparams, tile_b=1024):
    """x: (B, state_size) float32; kparams: output of prepare_params."""
    B, S = x.shape
    H = kparams["w1"].shape[1]
    A_pad = kparams["w3"].shape[1]
    A = kparams["action_size"]

    # Pad the batch only to a multiple of 16 (bf16 sublane pack); the grid is
    # ragged (last block masked on store), so no tile-multiple padding.
    B_pad = _round_up(B, 16)
    if B_pad != B:
        x = jnp.pad(x, ((0, B_pad - B), (0, 0)))
    tb = _choose_tile(B_pad, tile_b)
    grid = (pl.cdiv(B_pad, tb),)

    out = pl.pallas_call(
        _dqn_kernel,
        out_shape=jax.ShapeDtypeStruct((B_pad, A_pad), jnp.bfloat16),
        grid=grid,
        in_specs=[
            pl.BlockSpec((tb, S), lambda i: (i, 0)),       # batch-tiled f32 input
            pl.BlockSpec((S, H), lambda i: (0, 0)),        # resident weights/biases
            pl.BlockSpec((1, H), lambda i: (0, 0)),
            pl.BlockSpec((H, H), lambda i: (0, 0)),
            pl.BlockSpec((1, H), lambda i: (0, 0)),
            pl.BlockSpec((H, A_pad), lambda i: (0, 0)),
            pl.BlockSpec((1, A_pad), lambda i: (0, 0)),
        ],
        out_specs=pl.BlockSpec((tb, A_pad), lambda i: (i, 0)),
        compiler_params=pltpu.CompilerParams(
            dimension_semantics=("parallel",)),
    )(x, kparams["w1"], kparams["b1"], kparams["w2"], kparams["b2"],
      kparams["w3"], kparams["b3"])

    # Tiny (B, A) slice; cast back to f32 to preserve module output dtype.
    return out[:B, :A].astype(jnp.float32)


def init_params(key, state_size, action_size, hidden=64):
    """Deterministic init mimicking PyTorch's default Linear init (+/- 1/sqrt(fan_in))."""
    ks = jax.random.split(key, 6)

    def linear(kw, kb, fan_in, fan_out):
        bound = 1.0 / jnp.sqrt(fan_in)
        w = jax.random.uniform(kw, (fan_in, fan_out), jnp.float32, -bound, bound)
        b = jax.random.uniform(kb, (1, fan_out), jnp.float32, -bound, bound)
        return w, b

    w1, b1 = linear(ks[0], ks[1], state_size, hidden)
    w2, b2 = linear(ks[2], ks[3], hidden, hidden)
    w3, b3 = linear(ks[4], ks[5], hidden, action_size)
    return dict(w1=w1, b1=b1, w2=w2, b2=b2, w3=w3, b3=b3)


def dqn_reference_f32(x, params):
    """Pure-JAX full-f32 reference (module semantics)."""
    h = jnp.maximum(x @ params["w1"] + params["b1"], 0.0)
    h = jnp.maximum(h @ params["w2"] + params["b2"], 0.0)
    return h @ params["w3"] + params["b3"]


def dqn_reference_bf16(x, params):
    """Pure-JAX reference mirroring the kernel's numerics
    (bf16 operands, f32 accumulate/elementwise, bf16 final store)."""
    bf = jnp.bfloat16
    h = jnp.dot(x.astype(bf), params["w1"].astype(bf),
                preferred_element_type=jnp.float32)
    h = jnp.maximum(h + params["b1"], 0.0)
    h = jnp.dot(h.astype(bf), params["w2"].astype(bf),
                preferred_element_type=jnp.float32)
    h = jnp.maximum(h + params["b2"], 0.0)
    h = jnp.dot(h.astype(bf), params["w3"].astype(bf),
                preferred_element_type=jnp.float32)
    return (h + params["b3"]).astype(bf).astype(jnp.float32)


if __name__ == "__main__":
    # CliffWalking: 48 states (one-hot-ish), 4 actions.
    state_size, action_size = 48, 4

    key = jax.random.PRNGKey(0)
    kp, kx1, kx2 = jax.random.split(key, 3)
    params = init_params(kp, state_size, action_size)
    kernel_params = prepare_params(params)      # one-time cast/pad, not per call

    # Case 1: tiny inference batch (single 16-row tile, grid of 1).
    x_small = jax.random.uniform(kx1, (8, state_size), jnp.float32)
    # Case 2: ragged replay-buffer-style batch (2-tile grid, ragged last block).
    x_big = jax.random.uniform(kx2, (300, state_size), jnp.float32)

    for x in (x_small, x_big):
        out = jax.block_until_ready(dqn_forward(x, kernel_params))
        ref_bf16 = dqn_reference_bf16(x, params)
        ref_f32 = dqn_reference_f32(x, params)

        assert out.shape == (x.shape[0], action_size), out.shape
        # Tight vs a reference using the same bf16-operand / bf16-store scheme.
        assert jnp.allclose(out, ref_bf16, atol=2e-2, rtol=2e-2), \
            "mismatch vs bf16-mirrored reference"
        # Loose vs the full-f32 module semantics (bf16 quantization error only).
        assert jnp.allclose(out, ref_f32, atol=1e-1, rtol=1e-1), \
            "mismatch vs f32 reference"

    print("KERNEL_OK")
</pallas_src>

<mosaic_0001>
module attributes {stable_mosaic.version = 11 : i64} {
  func.func @_dqn_kernel(%arg0: i32, %arg1: memref<16x48xf32, #tpu.memory_space<vmem>>, %arg2: memref<48x64xbf16, #tpu.memory_space<vmem>>, %arg3: memref<1x64xf32, #tpu.memory_space<vmem>>, %arg4: memref<64x64xbf16, #tpu.memory_space<vmem>>, %arg5: memref<1x64xf32, #tpu.memory_space<vmem>>, %arg6: memref<64x128xbf16, #tpu.memory_space<vmem>>, %arg7: memref<1x128xf32, #tpu.memory_space<vmem>>, %arg8: memref<16x128xbf16, #tpu.memory_space<vmem>>) attributes {dimension_semantics = [#tpu.dimension_semantics<parallel>], iteration_bounds = array<i64: 1>, scalar_prefetch = 0 : i64, scratch_operands = 0 : i64, tpu.core_type = #tpu.core_type<tc>, window_params = [{transform_indices = @transform_0, window_bounds = array<i64: 16, 48>}, {pipeline_mode = #tpu.pipeline_mode<synchronous>, transform_indices = @transform_1, window_bounds = array<i64: 48, 64>}, {pipeline_mode = #tpu.pipeline_mode<synchronous>, transform_indices = @transform_2, window_bounds = array<i64: 1, 64>}, {pipeline_mode = #tpu.pipeline_mode<synchronous>, transform_indices = @transform_3, window_bounds = array<i64: 64, 64>}, {pipeline_mode = #tpu.pipeline_mode<synchronous>, transform_indices = @transform_4, window_bounds = array<i64: 1, 64>}, {pipeline_mode = #tpu.pipeline_mode<synchronous>, transform_indices = @transform_5, window_bounds = array<i64: 64, 128>}, {pipeline_mode = #tpu.pipeline_mode<synchronous>, transform_indices = @transform_6, window_bounds = array<i64: 1, 128>}, {transform_indices = @transform_7, window_bounds = array<i64: 16, 128>}]} {
    %c0 = arith.constant 0 : index
    %c0_0 = arith.constant 0 : index
    %0 = vector.load %arg1[%c0, %c0_0] : memref<16x48xf32, #tpu.memory_space<vmem>>, vector<16x48xf32>
    %1 = arith.truncf %0 : vector<16x48xf32> to vector<16x48xbf16>
    %c0_1 = arith.constant 0 : index
    %c0_2 = arith.constant 0 : index
    %2 = vector.load %arg2[%c0_1, %c0_2] : memref<48x64xbf16, #tpu.memory_space<vmem>>, vector<48x64xbf16>
    %cst = arith.constant dense<0.000000e+00> : vector<16x64xf32>
    %3 = tpu.matmul %1, %2, %cst {dimension_numbers = #tpu.dot_dimension_numbers<[1], [0], [0], [1], [0, 0, 1, 1], [], []>} : vector<16x48xbf16>, vector<48x64xbf16>, vector<16x64xf32> -> vector<16x64xf32>
    %c0_3 = arith.constant 0 : index
    %c0_4 = arith.constant 0 : index
    %4 = vector.load %arg3[%c0_3, %c0_4] : memref<1x64xf32, #tpu.memory_space<vmem>>, vector<1x64xf32>
    %5 = vector.broadcast %4 : vector<1x64xf32> to vector<16x64xf32>
    %6 = arith.addf %3, %5 : vector<16x64xf32>
    %cst_5 = arith.constant 0.000000e+00 : f32
    %7 = vector.broadcast %cst_5 : f32 to vector<16x64xf32>
    %8 = arith.maximumf %6, %7 : vector<16x64xf32>
    %9 = arith.truncf %8 : vector<16x64xf32> to vector<16x64xbf16>
    %c0_6 = arith.constant 0 : index
    %c0_7 = arith.constant 0 : index
    %10 = vector.load %arg4[%c0_6, %c0_7] : memref<64x64xbf16, #tpu.memory_space<vmem>>, vector<64x64xbf16>
    %cst_8 = arith.constant dense<0.000000e+00> : vector<16x64xf32>
    %11 = tpu.matmul %9, %10, %cst_8 {dimension_numbers = #tpu.dot_dimension_numbers<[1], [0], [0], [1], [0, 0, 1, 1], [], []>} : vector<16x64xbf16>, vector<64x64xbf16>, vector<16x64xf32> -> vector<16x64xf32>
    %c0_9 = arith.constant 0 : index
    %c0_10 = arith.constant 0 : index
    %12 = vector.load %arg5[%c0_9, %c0_10] : memref<1x64xf32, #tpu.memory_space<vmem>>, vector<1x64xf32>
    %13 = vector.broadcast %12 : vector<1x64xf32> to vector<16x64xf32>
    %14 = arith.addf %11, %13 : vector<16x64xf32>
    %cst_11 = arith.constant 0.000000e+00 : f32
    %15 = vector.broadcast %cst_11 : f32 to vector<16x64xf32>
    %16 = arith.maximumf %14, %15 : vector<16x64xf32>
    %17 = arith.truncf %16 : vector<16x64xf32> to vector<16x64xbf16>
    %c0_12 = arith.constant 0 : index
    %c0_13 = arith.constant 0 : index
    %18 = vector.load %arg6[%c0_12, %c0_13] : memref<64x128xbf16, #tpu.memory_space<vmem>>, vector<64x128xbf16>
    %cst_14 = arith.constant dense<0.000000e+00> : vector<16x128xf32>
    %19 = tpu.matmul %17, %18, %cst_14 {dimension_numbers = #tpu.dot_dimension_numbers<[1], [0], [0], [1], [0, 0, 1, 1], [], []>} : vector<16x64xbf16>, vector<64x128xbf16>, vector<16x128xf32> -> vector<16x128xf32>
    %c0_15 = arith.constant 0 : index
    %c0_16 = arith.constant 0 : index
    %20 = vector.load %arg7[%c0_15, %c0_16] : memref<1x128xf32, #tpu.memory_space<vmem>>, vector<1x128xf32>
    %21 = vector.broadcast %20 : vector<1x128xf32> to vector<16x128xf32>
    %22 = arith.addf %19, %21 : vector<16x128xf32>
    %23 = arith.truncf %22 : vector<16x128xf32> to vector<16x128xbf16>
    %c0_17 = arith.constant 0 : index
    %c0_18 = arith.constant 0 : index
    %24 = vector.load %arg8[%c0_17, %c0_18] : memref<16x128xbf16, #tpu.memory_space<vmem>>, vector<16x128xbf16>
    tpu.vector_store %arg8[%c0_17, %c0_18], %23 {strides = array<i32>} : memref<16x128xbf16, #tpu.memory_space<vmem>>, vector<16x128xbf16>,
    return
  }
  func.func @transform_0(%arg0: i32) -> (i32, i32) {
    %c0_i32 = arith.constant 0 : i32
    %c0_i32_0 = arith.constant 0 : i32
    return %arg0, %c0_i32 : i32, i32
  }
  func.func @transform_1(%arg0: i32) -> (i32, i32) {
    %c0_i32 = arith.constant 0 : i32
    %c0_i32_0 = arith.constant 0 : i32
    %c0_i32_1 = arith.constant 0 : i32
    return %c0_i32, %c0_i32_0 : i32, i32
  }
  func.func @transform_2(%arg0: i32) -> (i32, i32) {
    %c0_i32 = arith.constant 0 : i32
    %c0_i32_0 = arith.constant 0 : i32
    %c0_i32_1 = arith.constant 0 : i32
    return %c0_i32, %c0_i32_0 : i32, i32
  }
  func.func @transform_3(%arg0: i32) -> (i32, i32) {
    %c0_i32 = arith.constant 0 : i32
    %c0_i32_0 = arith.constant 0 : i32
    %c0_i32_1 = arith.constant 0 : i32
    return %c0_i32, %c0_i32_0 : i32, i32
  }
  func.func @transform_4(%arg0: i32) -> (i32, i32) {
    %c0_i32 = arith.constant 0 : i32
    %c0_i32_0 = arith.constant 0 : i32
    %c0_i32_1 = arith.constant 0 : i32
    return %c0_i32, %c0_i32_0 : i32, i32
  }
  func.func @transform_5(%arg0: i32) -> (i32, i32) {
    %c0_i32 = arith.constant 0 : i32
    %c0_i32_0 = arith.constant 0 : i32
    %c0_i32_1 = arith.constant 0 : i32
    return %c0_i32, %c0_i32_0 : i32, i32
  }
  func.func @transform_6(%arg0: i32) -> (i32, i32) {
    %c0_i32 = arith.constant 0 : i32
    %c0_i32_0 = arith.constant 0 : i32
    %c0_i32_1 = arith.constant 0 : i32
    return %c0_i32, %c0_i32_0 : i32, i32
  }
  func.func @transform_7(%arg0: i32) -> (i32, i32) {
    %c0_i32 = arith.constant 0 : i32
    %c0_i32_0 = arith.constant 0 : i32
    return %arg0, %c0_i32 : i32, i32
  }
}

</mosaic_0001>

<llo_original>
// kernel: tpu_custom_call.1
$region0: #{tpu_custom_call.1}
  #allocation0 [shape = 'u32[]', space=smem, size = 0x4, offset = 0x4, fixed_abs, tag = 'smem constant byte address 0x4 - core index']
  #allocation1 [shape = 'u32[144,128]{1,0:T(1,128)}', space=vmem, size = 0x12000, scoped, tag = 'internal scratch']
  %s0 = inlined_call_operand.hbm [shape: f32[16,48], index: 0, kind: input, shape index: {}]
  %s1 = inlined_call_operand.hbm [shape: bf16[48,64], index: 1, kind: input, shape index: {}]
  %s2 = inlined_call_operand.vmem [shape: f32[1,64], index: 2, kind: input, shape index: {}]
  %s3 = inlined_call_operand.hbm [shape: bf16[64,64], index: 3, kind: input, shape index: {}]
  %s4 = inlined_call_operand.vmem [shape: f32[1,64], index: 4, kind: input, shape index: {}]
  %s5 = inlined_call_operand.hbm [shape: bf16[64,128], index: 5, kind: input, shape index: {}]
  %s6 = inlined_call_operand.vmem [shape: f32[1,128], index: 6, kind: input, shape index: {}]
  %s7 = inlined_call_operand.hbm [shape: bf16[16,128], index: 7, kind: output, shape index: {}]
  %s8 = sld [smem:[#allocation0]]
  $region54: #{tpu_custom_call.1} parent=0
    _
  %s10 = ssub.s32 1, %s8
  %s11 = scalar_select 0, %s10, %s8
  $region1: #{tpu_custom_call.1} parent=0
    #allocation2 [shape = 'u8[8192]{0}', space=vmem, size = 0x2000, scoped, tag = 'input window, operand 0, single buffered']
    #allocation3 [shape = 's32[1]{0}', space=sflag, size = 0x4, scoped, tag = 'scoped memory for tpu_custom_call.1']
    #allocation4 [shape = 's32[1]{0}', space=sflag, size = 0x4, scoped, tag = 'scoped memory for tpu_custom_call.1']
    #allocation5 [shape = 'u8[12288]{0}', space=vmem, size = 0x3000, scoped, tag = 'input window, operand 1, single buffered']
    #allocation6 [shape = 's32[1]{0}', space=sflag, size = 0x4, scoped, tag = 'scoped memory for tpu_custom_call.1']
    #allocation7 [shape = 'u8[16384]{0}', space=vmem, size = 0x4000, scoped, tag = 'input window, operand 3, single buffered']
    #allocation8 [shape = 'u8[16384]{0}', space=vmem, size = 0x4000, scoped, tag = 'input window, operand 5, single buffered']
    #allocation9 [shape = 's32[1]{0}', space=sflag, size = 0x4, scoped, tag = 'scoped memory for tpu_custom_call.1']
    #allocation10 [shape = 'u8[4096]{0}', space=vmem, size = 0x1000, scoped, tag = 'output window, operand 0, single buffered']
    %12 = vsyncpa [#allocation3], 0
    %13 = vsyncpa [#allocation6], 0
    %14 = vsyncpa [#allocation9], 0
    %15 = vsyncpa [#allocation4], 0
    // Predicated region
    $region2: #{tpu_custom_call.1} parent=1 // pred_check
      _
    $region3: #{tpu_custom_call.1} parent=1 // pred_check_branch
      %17 = sbr.rel (0) target = $region5
    $region4: #{tpu_custom_call.1} parent=1 // pred_region
      %s19 = ssub.s32 256, 256
      %20 = vsyncadd [#allocation3], %s19
      %s21 = sshll.u32 [#allocation2], 4
      %s22 = int_to_ptr.vmem [resolvable:$true] %s21
      %27 = dma.hbm_to_vmem [thread:$0]  %s0, 256, %s22, [#allocation3], 128, 128, 8
    $region5: #{tpu_custom_call.1} parent=1 // pred_fallthru
      _
    // Predicated region
    $region6: #{tpu_custom_call.1} parent=1 // pred_check
      _
    $region7: #{tpu_custom_call.1} parent=1 // pred_check_branch
      %29 = sbr.rel (0) target = $region9
    $region8: #{tpu_custom_call.1} parent=1 // pred_region
      %s31 = ssub.s32 384, 384
      %32 = vsyncadd [#allocation6], %s31
      %s33 = sshll.u32 [#allocation5], 4
      %s34 = int_to_ptr.vmem [resolvable:$true] %s33
      %39 = dma.hbm_to_vmem [thread:$0]  %s1, 384, %s34, [#allocation6], 64, 64, 4
    $region9: #{tpu_custom_call.1} parent=1 // pred_fallthru
      _
    // Predicated region
    $region10: #{tpu_custom_call.1} parent=1 // pred_check
      _
    $region11: #{tpu_custom_call.1} parent=1 // pred_check_branch
      %41 = sbr.rel (0) target = $region13
    $region12: #{tpu_custom_call.1} parent=1 // pred_region
      _
    $region13: #{tpu_custom_call.1} parent=1 // pred_fallthru
      _
    // Predicated region
    $region14: #{tpu_custom_call.1} parent=1 // pred_check
      _
    $region15: #{tpu_custom_call.1} parent=1 // pred_check_branch
      %43 = sbr.rel (0) target = $region17
    $region16: #{tpu_custom_call.1} parent=1 // pred_region
      %s45 = ssub.s32 512, 512
      %46 = vsyncadd [#allocation6], %s45
      %s47 = sshll.u32 [#allocation7], 4
      %s48 = int_to_ptr.vmem [resolvable:$true] %s47
      %53 = dma.hbm_to_vmem [thread:$0]  %s3, 512, %s48, [#allocation6], 64, 64, 4
    $region17: #{tpu_custom_call.1} parent=1 // pred_fallthru
      _
    // Predicated region
    $region18: #{tpu_custom_call.1} parent=1 // pred_check
      _
    $region19: #{tpu_custom_call.1} parent=1 // pred_check_branch
      %55 = sbr.rel (0) target = $region21
    $region20: #{tpu_custom_call.1} parent=1 // pred_region
      _
    $region21: #{tpu_custom_call.1} parent=1 // pred_fallthru
      _
    // Predicated region
    $region22: #{tpu_custom_call.1} parent=1 // pred_check
      _
    $region23: #{tpu_custom_call.1} parent=1 // pred_check_branch
      %57 = sbr.rel (0) target = $region25
    $region24: #{tpu_custom_call.1} parent=1 // pred_region
      %s59 = ssub.s32 512, 512
      %60 = vsyncadd [#allocation9], %s59
      %s61 = sshll.u32 [#allocation8], 4
      %s62 = int_to_ptr.vmem [resolvable:$true] %s61
      %67 = dma.hbm_to_vmem [thread:$0]  %s5, 512, %s62, [#allocation9], 64, 64, 4
    $region25: #{tpu_custom_call.1} parent=1 // pred_fallthru
      _
    // Predicated region
    $region26: #{tpu_custom_call.1} parent=1 // pred_check
      _
    $region27: #{tpu_custom_call.1} parent=1 // pred_check_branch
      %69 = sbr.rel (0) target = $region29
    $region28: #{tpu_custom_call.1} parent=1 // pred_region
      _
    $region29: #{tpu_custom_call.1} parent=1 // pred_fallthru
      _
    // Predicated region
    $region30: #{tpu_custom_call.1} parent=1 // pred_check
      _
    $region31: #{tpu_custom_call.1} parent=1 // pred_check_branch
      %71 = sbr.rel (0) target = $region33
    $region32: #{tpu_custom_call.1} parent=1 // pred_region
      %72 = dma.done [#allocation3], 256
    $region33: #{tpu_custom_call.1} parent=1 // pred_fallthru
      _
    // Predicated region
    $region34: #{tpu_custom_call.1} parent=1 // pred_check
      _
    $region35: #{tpu_custom_call.1} parent=1 // pred_check_branch
      %74 = sbr.rel (0) target = $region37
    $region36: #{tpu_custom_call.1} parent=1 // pred_region
      %75 = dma.done [#allocation6], 384
    $region37: #{tpu_custom_call.1} parent=1 // pred_fallthru
      _
    // Predicated region
    $region38: #{tpu_custom_call.1} parent=1 // pred_check
      _
    $region39: #{tpu_custom_call.1} parent=1 // pred_check_branch
      %77 = sbr.rel (0) target = $region41
    $region40: #{tpu_custom_call.1} parent=1 // pred_region
      %78 = dma.done [#allocation6], 512
    $region41: #{tpu_custom_call.1} parent=1 // pred_fallthru
      _
    // Predicated region
    $region42: #{tpu_custom_call.1} parent=1 // pred_check
      _
    $region43: #{tpu_custom_call.1} parent=1 // pred_check_branch
      %80 = sbr.rel (0) target = $region45
    $region44: #{tpu_custom_call.1} parent=1 // pred_region
      %81 = dma.done [#allocation9], 512
    $region45: #{tpu_custom_call.1} parent=1 // pred_fallthru
      _
    %v83 = vld [vmem:[#allocation2] sm:$0xff]
    %v84 = vld [vmem:[#allocation2 + $0x8] sm:$0xff]
    %v85 = vpack.c.bf16 %v84, %v83
    %v86 = vld [vmem:[#allocation5] sm:$0xf]
    %v87 = vld [vmem:[#allocation5 + $0x4] sm:$0xf]
    %v88 = vld [vmem:[#allocation5 + $0x8] sm:$0xf]
    %v89 = vld [vmem:[#allocation5 + $0xc] sm:$0xf]
    %v90 = vld [vmem:[#allocation5 + $0x10] sm:$0xf]
    %v91 = vld [vmem:[#allocation5 + $0x14] sm:$0xf]
    %v92 = vld [vmem:[%s2] sm:$0x1]
    %v94 = vlaneseq
    %v95 = vshrl.u32 %v94, 7
    %v96 = vsub.s32 0, %v95
    %v97 = vrot.slane %v92, %v96
    %v105 = vunpack.c.l.b16 %v86
    %v106 = vunpack.c.l.b16 %v87
    %v107 = vunpack.c.l.b16 %v88
    %v108 = vunpack.c.l.b16 %v89
    %v109 = vunpack.c.l.b16 %v90
    %v110 = vunpack.c.l.b16 %v91
    %v111 = vpack.c.b16 %v106, %v105
    %v112 = vpack.c.b16 %v108, %v107
    %v113 = vpack.c.b16 %v110, %v109
    %vm117 = vcmask 392192
    %v119 = vsel %vm117, %v85, 0
    %121 = vmatprep.subr.bf16.mxu0 0
    %122 = vmatpush1.bf16.msra.mxu0 0
    %123 = vmatprep.subr.bf16.mxu0 0
    %124 = vmatpush1.bf16.msra.mxu0 0
    %125 = vmatprep.subr.bf16.mxu0 0
    %126 = vmatpush1.bf16.msra.mxu0 0
    %127 = vmatprep.subr.bf16.mxu0 0
    %128 = vmatpush1.bf16.msra.mxu0 0
    %129 = vmatprep.subr.bf16.mxu0 0
    %130 = vmatpush1.bf16.msra.mxu0 0
    %131 = vmatprep.subr.bf16.mxu0 0
    %132 = vmatpush1.bf16.msra.mxu0 %v113
    %133 = vmatprep.subr.bf16.mxu0 0
    %134 = vmatpush1.bf16.msra.mxu0 %v112
    %135 = vmatprep.subr.bf16.mxu0 0
    %136 = vmatpush1.bf16.msra.mxu0 %v111
    %137 = vmatprep.subr.bf16.mxu0 0
    %138 = vmatpush2.bf16.msra.mxu0 0
    %139 = vmatprep.subr.bf16.mxu0 0
    %140 = vmatpush2.bf16.msra.mxu0 0
    %141 = vmatprep.subr.bf16.mxu0 0
    %142 = vmatpush2.bf16.msra.mxu0 0
    %143 = vmatprep.subr.bf16.mxu0 0
    %144 = vmatpush2.bf16.msra.mxu0 0
    %145 = vmatprep.subr.bf16.mxu0 0
    %146 = vmatpush2.bf16.msra.mxu0 0
    %147 = vmatprep.subr.bf16.mxu0 0
    %148 = vmatpush2.bf16.msra.mxu0 0
    %149 = vmatprep.subr.bf16.mxu0 0
    %150 = vmatpush2.bf16.msra.mxu0 0
    %151 = vmatprep.subr.bf16.mxu0 0
    %152 = vmatpush2.bf16.msra.mxu0 0
    %153 = vmatprep.mubr.bf16.mxu0 0
    %154 = vmatmul.mubr.bf16.gmra.mxu0 %v119
    %v155 = vpop.f32.mrf.mxu0
    %v156 = vadd.f32 %v97, %v155
    %v157 = vpop.f32.mrf.mxu0
    %v158 = vpop.f32.mrf.mxu0
    %v159 = vadd.f32 %v97, %v158
    %v160 = vpop.f32.mrf.mxu0
    %161 = vdwg.mxu0
    %v162 = vmax.f32 %v156, 0.0
    %v163 = vmax.f32 %v159, 0.0
    %v164 = vpack.c.bf16 %v163, %v162
    %v165 = vld [vmem:[#allocation7] sm:$0xf]
    %v166 = vld [vmem:[#allocation7 + $0x4] sm:$0xf]
    %v167 = vld [vmem:[#allocation7 + $0x8] sm:$0xf]
    %v168 = vld [vmem:[#allocation7 + $0xc] sm:$0xf]
    %v169 = vld [vmem:[#allocation7 + $0x10] sm:$0xf]
    %v170 = vld [vmem:[#allocation7 + $0x14] sm:$0xf]
    %v171 = vld [vmem:[#allocation7 + $0x18] sm:$0xf]
    %v172 = vld [vmem:[#allocation7 + $0x1c] sm:$0xf]
    %v173 = vld [vmem:[%s4] sm:$0x1]
    %v175 = vlaneseq
    %v176 = vshrl.u32 %v175, 7
    %v177 = vsub.s32 0, %v176
    %v178 = vrot.slane %v173, %v177
    %v188 = vunpack.c.l.b16 %v165
    %v189 = vunpack.c.l.b16 %v166
    %v190 = vunpack.c.l.b16 %v167
    %v191 = vunpack.c.l.b16 %v168
    %v192 = vunpack.c.l.b16 %v169
    %v193 = vunpack.c.l.b16 %v170
    %v194 = vunpack.c.l.b16 %v171
    %v195 = vunpack.c.l.b16 %v172
    %v196 = vpack.c.b16 %v189, %v188
    %v197 = vpack.c.b16 %v191, %v190
    %v198 = vpack.c.b16 %v193, %v192
    %v199 = vpack.c.b16 %v195, %v194
    %vm204 = vcmask 523264
    %v206 = vsel %vm204, %v164, 0
    %208 = vmatprep.subr.bf16.mxu0 0
    %209 = vmatpush1.bf16.msra.mxu0 0
    %210 = vmatprep.subr.bf16.mxu0 0
    %211 = vmatpush1.bf16.msra.mxu0 0
    %212 = vmatprep.subr.bf16.mxu0 0
    %213 = vmatpush1.bf16.msra.mxu0 0
    %214 = vmatprep.subr.bf16.mxu0 0
    %215 = vmatpush1.bf16.msra.mxu0 0
    %216 = vmatprep.subr.bf16.mxu0 0
    %217 = vmatpush1.bf16.msra.mxu0 %v199
    %218 = vmatprep.subr.bf16.mxu0 0
    %219 = vmatpush1.bf16.msra.mxu0 %v198
    %220 = vmatprep.subr.bf16.mxu0 0
    %221 = vmatpush1.bf16.msra.mxu0 %v197
    %222 = vmatprep.subr.bf16.mxu0 0
    %223 = vmatpush1.bf16.msra.mxu0 %v196
    %224 = vmatprep.subr.bf16.mxu0 0
    %225 = vmatpush2.bf16.msra.mxu0 0
    %226 = vmatprep.subr.bf16.mxu0 0
    %227 = vmatpush2.bf16.msra.mxu0 0
    %228 = vmatprep.subr.bf16.mxu0 0
    %229 = vmatpush2.bf16.msra.mxu0 0
    %230 = vmatprep.subr.bf16.mxu0 0
    %231 = vmatpush2.bf16.msra.mxu0 0
    %232 = vmatprep.subr.bf16.mxu0 0
    %233 = vmatpush2.bf16.msra.mxu0 0
    %234 = vmatprep.subr.bf16.mxu0 0
    %235 = vmatpush2.bf16.msra.mxu0 0
    %236 = vmatprep.subr.bf16.mxu0 0
    %237 = vmatpush2.bf16.msra.mxu0 0
    %238 = vmatprep.subr.bf16.mxu0 0
    %239 = vmatpush2.bf16.msra.mxu0 0
    %240 = vmatprep.mubr.bf16.mxu0 0
    %241 = vmatmul.mubr.bf16.gmra.mxu0 %v206
    %v242 = vpop.f32.mrf.mxu0
    %v243 = vadd.f32 %v178, %v242
    %v244 = vpop.f32.mrf.mxu0
    %v245 = vpop.f32.mrf.mxu0
    %v246 = vadd.f32 %v178, %v245
    %v247 = vpop.f32.mrf.mxu0
    %248 = vdwg.mxu0
    %v249 = vmax.f32 %v243, 0.0
    %v250 = vmax.f32 %v246, 0.0
    %v251 = vpack.c.bf16 %v250, %v249
    %v252 = vld [vmem:[#allocation8] sm:$0xf]
    %v253 = vld [vmem:[#allocation8 + $0x4] sm:$0xf]
    %v254 = vld [vmem:[#allocation8 + $0x8] sm:$0xf]
    %v255 = vld [vmem:[#allocation8 + $0xc] sm:$0xf]
    %v256 = vld [vmem:[#allocation8 + $0x10] sm:$0xf]
    %v257 = vld [vmem:[#allocation8 + $0x14] sm:$0xf]
    %v258 = vld [vmem:[#allocation8 + $0x18] sm:$0xf]
    %v259 = vld [vmem:[#allocation8 + $0x1c] sm:$0xf]
    %v260 = vld [vmem:[%s6] sm:$0x1]
    %v262 = vlaneseq
    %v263 = vshrl.u32 %v262, 7
    %v264 = vsub.s32 0, %v263
    %v265 = vrot.slane %v260, %v264
    %v275 = vunpack.c.l.b16 %v252
    %v276 = vunpack.c.l.b16 %v253
    %v277 = vunpack.c.l.b16 %v254
    %v278 = vunpack.c.l.b16 %v255
    %v279 = vunpack.c.l.b16 %v256
    %v280 = vunpack.c.l.b16 %v257
    %v281 = vunpack.c.l.b16 %v258
    %v282 = vunpack.c.l.b16 %v259
    %v283 = vpack.c.b16 %v276, %v275
    %v284 = vpack.c.b16 %v278, %v277
    %v285 = vpack.c.b16 %v280, %v279
    %v286 = vpack.c.b16 %v282, %v281
    %v292 = vsel %vm204, %v251, 0
    %294 = vmatprep.subr.bf16.mxu0 0
    %295 = vmatpush1.bf16.msra.mxu0 0
    %296 = vmatprep.subr.bf16.mxu0 0
    %297 = vmatpush1.bf16.msra.mxu0 0
    %298 = vmatprep.subr.bf16.mxu0 0
    %299 = vmatpush1.bf16.msra.mxu0 0
    %300 = vmatprep.subr.bf16.mxu0 0
    %301 = vmatpush1.bf16.msra.mxu0 0
    %302 = vmatprep.subr.bf16.mxu0 0
    %303 = vmatpush1.bf16.msra.mxu0 %v286
    %304 = vmatprep.subr.bf16.mxu0 0
    %305 = vmatpush1.bf16.msra.mxu0 %v285
    %306 = vmatprep.subr.bf16.mxu0 0
    %307 = vmatpush1.bf16.msra.mxu0 %v284
    %308 = vmatprep.subr.bf16.mxu0 0
    %309 = vmatpush1.bf16.msra.mxu0 %v283
    %310 = vmatprep.subr.bf16.mxu0 0
    %311 = vmatpush2.bf16.msra.mxu0 0
    %312 = vmatprep.subr.bf16.mxu0 0
    %313 = vmatpush2.bf16.msra.mxu0 0
    %314 = vmatprep.subr.bf16.mxu0 0
    %315 = vmatpush2.bf16.msra.mxu0 0
    %316 = vmatprep.subr.bf16.mxu0 0
    %317 = vmatpush2.bf16.msra.mxu0 0
    %318 = vmatprep.subr.bf16.mxu0 0
    %319 = vmatpush2.bf16.msra.mxu0 0
    %320 = vmatprep.subr.bf16.mxu0 0
    %321 = vmatpush2.bf16.msra.mxu0 0
    %322 = vmatprep.subr.bf16.mxu0 0
    %323 = vmatpush2.bf16.msra.mxu0 0
    %324 = vmatprep.subr.bf16.mxu0 0
    %325 = vmatpush2.bf16.msra.mxu0 0
    %326 = vmatprep.mubr.bf16.mxu0 0
    %327 = vmatmul.mubr.bf16.gmra.mxu0 %v292
    %v328 = vpop.f32.mrf.mxu0
    %v329 = vadd.f32 %v265, %v328
    %v330 = vpop.f32.mrf.mxu0
    %v331 = vpop.f32.mrf.mxu0
    %v332 = vadd.f32 %v265, %v331
    %v333 = vpop.f32.mrf.mxu0
    %334 = vdwg.mxu0
    %v335 = vpack.c.bf16 %v332, %v329
    %v337 = vunpack.c.l.b16 %v335
    %v338 = vunpack.c.h.b16 %v335
    %v339 = vpack.c.b16 %v337, %v337
    %v340 = vpack.c.b16 %v338, %v338
    %343 = vst [vmem:[#allocation10] sm:$0xf] %v339
    %344 = vst [vmem:[#allocation10 + $0x4] sm:$0xf] %v340
    // Predicated region
    $region46: #{tpu_custom_call.1} parent=1 // pred_check
      _
    $region47: #{tpu_custom_call.1} parent=1 // pred_check_branch
      %346 = sbr.rel (0) target = $region49
    $region48: #{tpu_custom_call.1} parent=1 // pred_region
      %s348 = ssub.s32 128, 128
      %349 = vsyncadd [#allocation4], %s348
      %s350 = sshll.u32 [#allocation10], 4
      %s351 = int_to_ptr.vmem [resolvable:$true] %s350
      %356 = dma.vmem_to_hbm [thread:$0]  %s351, 128, %s7, [#allocation4], 64, 64, 4
    $region49: #{tpu_custom_call.1} parent=1 // pred_fallthru
      _
    // Predicated region
    $region50: #{tpu_custom_call.1} parent=1 // pred_check
      _
    $region51: #{tpu_custom_call.1} parent=1 // pred_check_branch
      %358 = sbr.rel (0) target = $region53
    $region52: #{tpu_custom_call.1} parent=1 // pred_region
      %359 = dma.done [#allocation4], 128
    $region53: #{tpu_custom_call.1} parent=1 // pred_fallthru
      _
    %360 = vsyncpa [#allocation3], 1
    %361 = vsyncpa [#allocation6], 1
    %362 = vsyncpa [#allocation9], 1
    %363 = vsyncpa [#allocation4], 1

</llo_original>
